<compile_context>
chip_gen: v5e
topology: v5e:2x2
jax: 0.10.0
libtpu: 0.0.40
codegen_flags: <defaults>
</compile_context>

<pallas_src>
import jax
import jax.numpy as jnp
from jax.experimental import pallas as pl
from jax.experimental.pallas import tpu as pltpu


# ---------------------------------------------------------------------------
# Kernels
# ---------------------------------------------------------------------------
def _planar_flow_packed_kernel(z_ref, m_ref, s_ref, b_ref, o_ref):
    """Lane-dense path: z_ref is (TB, 128) with P logical rows per vreg row."""
    z = z_ref[...]                                            # (TB, 128)
    # Block-structured matmul on the MXU; f32 accumulation.  Each lane j gets
    # the activation of the logical row living in its own D-lane segment.
    act = jnp.dot(z, m_ref[...], preferred_element_type=jnp.float32)
    act = act + b_ref[0]                                      # scalar bias (SMEM)
    o_ref[...] = (z + s_ref[...] * jnp.tanh(act)).astype(o_ref.dtype)


def _planar_flow_reduce_kernel(z_ref, w_ref, s_ref, b_ref, o_ref):
    """Fallback path (D does not pack into 128 lanes): lane reduction."""
    z = z_ref[...]                                            # (TB, D)
    z32 = z.astype(jnp.float32)
    w32 = w_ref[...].astype(jnp.float32)                      # (1, D)
    act = jnp.sum(z32 * w32, axis=-1, keepdims=True) + b_ref[0]   # (TB, 1) f32
    o_ref[...] = (z32 + s_ref[...] * jnp.tanh(act)).astype(o_ref.dtype)


# ---------------------------------------------------------------------------
# Wrapper
# ---------------------------------------------------------------------------
def planar_flow(z, weight, scale, bias, *, block_rows=2048):
    """z: (B, D); weight, scale: (1, D); bias: (1,)."""
    B, D = z.shape
    weight = weight.astype(jnp.float32)
    scale = scale.astype(jnp.float32)
    bias = bias.reshape(1).astype(jnp.float32)

    compiler_params = pltpu.CompilerParams(dimension_semantics=("parallel",))

    if D <= 128 and 128 % D == 0:
        # -------- lane-dense packed path --------
        P = 128 // D
        L = P * D                                             # = 128
        rows = -(-B // P)                                     # packed rows
        TB = min(block_rows, rows)                            # block_rows % 8 == 0
        grid_n = -(-rows // TB)
        rows_p = grid_n * TB
        Bp = rows_p * P

        z_p = z if Bp == B else jnp.zeros((Bp, D), z.dtype).at[:B].set(z)
        z_packed = z_p.reshape(rows_p, L)

        # Block-structured projection matrix: M[d, j] = w[d % D] if the two
        # indices fall in the same D-lane segment, else 0.
        d_idx = jnp.arange(L)
        same_seg = (d_idx[:, None] // D) == (d_idx[None, :] // D)
        M = jnp.where(same_seg, weight.reshape(-1)[d_idx % D][:, None],
                      jnp.float32(0.0))                        # (128, 128)
        s_tiled = jnp.tile(scale, (1, P))                      # (1, 128)

        out_packed = pl.pallas_call(
            _planar_flow_packed_kernel,
            out_shape=jax.ShapeDtypeStruct((rows_p, L), z.dtype),
            grid=(grid_n,),
            in_specs=[
                pl.BlockSpec((TB, L), lambda i: (i, 0)),             # z (streamed)
                pl.BlockSpec((L, L), lambda i: (0, 0)),              # M (resident)
                pl.BlockSpec((1, L), lambda i: (0, 0)),              # scale (resident)
                pl.BlockSpec(memory_space=pltpu.MemorySpace.SMEM),   # bias scalar
            ],
            out_specs=pl.BlockSpec((TB, L), lambda i: (i, 0)),
            compiler_params=compiler_params,
        )(z_packed, M, s_tiled, bias)

        return out_packed.reshape(Bp, D)[:B]

    # -------- fallback: keep D on the lane axis, VPU lane reduction --------
    TB = min(block_rows, B)
    grid_n = -(-B // TB)
    Bp = grid_n * TB
    z_p = z if Bp == B else jnp.zeros((Bp, D), z.dtype).at[:B].set(z)

    out = pl.pallas_call(
        _planar_flow_reduce_kernel,
        out_shape=jax.ShapeDtypeStruct((Bp, D), z.dtype),
        grid=(grid_n,),
        in_specs=[
            pl.BlockSpec((TB, D), lambda i: (i, 0)),                 # z (streamed)
            pl.BlockSpec((1, D), lambda i: (0, 0)),                  # weight
            pl.BlockSpec((1, D), lambda i: (0, 0)),                  # scale
            pl.BlockSpec(memory_space=pltpu.MemorySpace.SMEM),       # bias scalar
        ],
        out_specs=pl.BlockSpec((TB, D), lambda i: (i, 0)),
        compiler_params=compiler_params,
    )(z_p, weight, scale, bias)
    return out[:B]


# ---------------------------------------------------------------------------
# Reference
# ---------------------------------------------------------------------------
def planar_flow_ref(z, weight, scale, bias):
    activation = z @ weight.T + bias          # (B, 1)
    return z + scale * jnp.tanh(activation)


if __name__ == "__main__":
    D = 32
    key = jax.random.PRNGKey(0)
    kz, kw, ks, kb = jax.random.split(key, 4)

    # Deterministic parameter init matching reset_parameters(): U(-0.01, 0.01)
    weight = jax.random.uniform(kw, (1, D), jnp.float32, -0.01, 0.01)
    scale = jax.random.uniform(ks, (1, D), jnp.float32, -0.01, 0.01)
    bias = jax.random.uniform(kb, (1,), jnp.float32, -0.01, 0.01)

    # (B=8): small module-spec shape, single block.
    # (B=100, block_rows=8): exercises the batch grid, padding and slicing.
    for B, brows in ((8, 2048), (100, 8)):
        z = jax.random.normal(jax.random.fold_in(kz, B), (B, D), jnp.float32)
        out = planar_flow(z, weight, scale, bias, block_rows=brows)
        out = jax.block_until_ready(out)
        ref = planar_flow_ref(z, weight, scale, bias)
        assert out.shape == (B, D) and out.dtype == jnp.float32
        assert jnp.allclose(out, ref, atol=1e-5, rtol=1e-5), (
            B, float(jnp.max(jnp.abs(out - ref))))

    print("KERNEL_OK")
</pallas_src>

<mosaic_0001>
module attributes {stable_mosaic.version = 11 : i64} {
  func.func @_planar_flow_packed_kernel(%arg0: i32, %arg1: memref<2x128xf32, #tpu.memory_space<vmem>>, %arg2: memref<128x128xf32, #tpu.memory_space<vmem>>, %arg3: memref<1x128xf32, #tpu.memory_space<vmem>>, %arg4: memref<1xf32, #tpu.memory_space<smem>>, %arg5: memref<2x128xf32, #tpu.memory_space<vmem>>) attributes {dimension_semantics = [#tpu.dimension_semantics<parallel>], iteration_bounds = array<i64: 1>, scalar_prefetch = 0 : i64, scratch_operands = 0 : i64, tpu.core_type = #tpu.core_type<tc>, window_params = [{transform_indices = @transform_0, window_bounds = array<i64: 2, 128>}, {pipeline_mode = #tpu.pipeline_mode<synchronous>, transform_indices = @transform_1, window_bounds = array<i64: 128, 128>}, {pipeline_mode = #tpu.pipeline_mode<synchronous>, transform_indices = @transform_2, window_bounds = array<i64: 1, 128>}, {transform_indices = @transform_3, window_bounds = array<i64: 1>}, {transform_indices = @transform_4, window_bounds = array<i64: 2, 128>}]} {
    %c0 = arith.constant 0 : index
    %c0_0 = arith.constant 0 : index
    %0 = vector.load %arg1[%c0, %c0_0] : memref<2x128xf32, #tpu.memory_space<vmem>>, vector<2x128xf32>
    %c0_1 = arith.constant 0 : index
    %c0_2 = arith.constant 0 : index
    %1 = vector.load %arg2[%c0_1, %c0_2] : memref<128x128xf32, #tpu.memory_space<vmem>>, vector<128x128xf32>
    %cst = arith.constant dense<0.000000e+00> : vector<2x128xf32>
    %2 = tpu.matmul %0, %1, %cst {dimension_numbers = #tpu.dot_dimension_numbers<[1], [0], [0], [1], [0, 0, 1, 1], [], []>} : vector<2x128xf32>, vector<128x128xf32>, vector<2x128xf32> -> vector<2x128xf32>
    %c0_3 = arith.constant 0 : index
    %3 = memref.load %arg4[%c0_3] : memref<1xf32, #tpu.memory_space<smem>>
    %4 = vector.broadcast %3 : f32 to vector<2x128xf32>
    %5 = arith.addf %2, %4 : vector<2x128xf32>
    %c0_4 = arith.constant 0 : index
    %c0_5 = arith.constant 0 : index
    %6 = vector.load %arg3[%c0_4, %c0_5] : memref<1x128xf32, #tpu.memory_space<vmem>>, vector<1x128xf32>
    %7 = math.tanh %5 : vector<2x128xf32>
    %8 = vector.broadcast %6 : vector<1x128xf32> to vector<2x128xf32>
    %9 = arith.mulf %8, %7 : vector<2x128xf32>
    %10 = arith.addf %0, %9 : vector<2x128xf32>
    %c0_6 = arith.constant 0 : index
    %c0_7 = arith.constant 0 : index
    %11 = vector.load %arg5[%c0_6, %c0_7] : memref<2x128xf32, #tpu.memory_space<vmem>>, vector<2x128xf32>
    tpu.vector_store %arg5[%c0_6, %c0_7], %10 {strides = array<i32>} : memref<2x128xf32, #tpu.memory_space<vmem>>, vector<2x128xf32>,
    return
  }
  func.func @transform_0(%arg0: i32) -> (i32, i32) {
    %c0_i32 = arith.constant 0 : i32
    %c0_i32_0 = arith.constant 0 : i32
    return %arg0, %c0_i32 : i32, i32
  }
  func.func @transform_1(%arg0: i32) -> (i32, i32) {
    %c0_i32 = arith.constant 0 : i32
    %c0_i32_0 = arith.constant 0 : i32
    %c0_i32_1 = arith.constant 0 : i32
    return %c0_i32, %c0_i32_0 : i32, i32
  }
  func.func @transform_2(%arg0: i32) -> (i32, i32) {
    %c0_i32 = arith.constant 0 : i32
    %c0_i32_0 = arith.constant 0 : i32
    %c0_i32_1 = arith.constant 0 : i32
    return %c0_i32, %c0_i32_0 : i32, i32
  }
  func.func @transform_3(%arg0: i32) -> i32 {
    %c0_i32 = arith.constant 0 : i32
    %c0_i32_0 = arith.constant 0 : i32
    return %c0_i32 : i32
  }
  func.func @transform_4(%arg0: i32) -> (i32, i32) {
    %c0_i32 = arith.constant 0 : i32
    %c0_i32_0 = arith.constant 0 : i32
    return %arg0, %c0_i32 : i32, i32
  }
}

</mosaic_0001>

<llo_original>
// kernel: tpu_custom_call.1
$region0: #{tpu_custom_call.1}
  #allocation0 [shape = 'u32[]', space=smem, size = 0x4, offset = 0x4, fixed_abs, tag = 'smem constant byte address 0x4 - core index']
  #allocation1 [shape = 'u32[72,128]{1,0:T(1,128)}', space=vmem, size = 0x9000, scoped, tag = 'internal scratch']
  #allocation2 [shape = 'f32[1]{0:T(128)S(6)}', space=smem, size = 0x200, scoped, tag = 'scoped memory for tpu_custom_call.1']
  %s0 = inlined_call_operand.vmem [shape: f32[2,128], index: 0, kind: input, shape index: {}]
  %s1 = inlined_call_operand.hbm [shape: f32[128,128], index: 1, kind: input, shape index: {}]
  %s2 = inlined_call_operand.vmem [shape: f32[1,128], index: 2, kind: input, shape index: {}]
  %s3 = inlined_call_operand.<no memory space> [shape: f32[1], index: 3, kind: input, shape index: {}]
  %s4 = inlined_call_operand.hbm [shape: f32[2,128], index: 4, kind: output, shape index: {}]
  %s5 = sld [smem:[#allocation0]]
  $region30: #{tpu_custom_call.1} parent=0
    _
  %s7 = ssub.s32 1, %s5
  %s8 = scalar_select 0, %s7, %s5
  %9 = sst [smem:[#allocation2]] %s3
  $region1: #{tpu_custom_call.1} parent=0
    #allocation3 [shape = 'u8[65536]{0}', space=vmem, size = 0x10000, scoped, tag = 'input window, operand 1, single buffered']
    #allocation4 [shape = 's32[1]{0}', space=sflag, size = 0x4, scoped, tag = 'scoped memory for tpu_custom_call.1']
    #allocation5 [shape = 's32[1]{0}', space=sflag, size = 0x4, scoped, tag = 'scoped memory for tpu_custom_call.1']
    #allocation6 [shape = 'u8[1024]{0}', space=vmem, size = 0x400, scoped, tag = 'output window, operand 0, single buffered']
    %10 = vsyncpa [#allocation4], 0
    %11 = vsyncpa [#allocation5], 0
    // Predicated region
    $region2: #{tpu_custom_call.1} parent=1 // pred_check
      _
    $region3: #{tpu_custom_call.1} parent=1 // pred_check_branch
      %13 = sbr.rel (0) target = $region5
    $region4: #{tpu_custom_call.1} parent=1 // pred_region
      _
    $region5: #{tpu_custom_call.1} parent=1 // pred_fallthru
      _
    // Predicated region
    $region6: #{tpu_custom_call.1} parent=1 // pred_check
      _
    $region7: #{tpu_custom_call.1} parent=1 // pred_check_branch
      %15 = sbr.rel (0) target = $region9
    $region8: #{tpu_custom_call.1} parent=1 // pred_region
      %17 = vsyncadd [#allocation4], 0
      %s18 = sshll.u32 %s1, 4
      %s19 = int_to_ptr.hbm [resolvable:$true] %s18
      %s20 = sshll.u32 [#allocation3], 4
      %s21 = int_to_ptr.vmem [resolvable:$true] %s20
      %26 = dma.hbm_to_vmem [thread:$0]  %s19, 2048, %s21, [#allocation4], 128, 128, 8
    $region9: #{tpu_custom_call.1} parent=1 // pred_fallthru
      _
    // Predicated region
    $region10: #{tpu_custom_call.1} parent=1 // pred_check
      _
    $region11: #{tpu_custom_call.1} parent=1 // pred_check_branch
      %28 = sbr.rel (0) target = $region13
    $region12: #{tpu_custom_call.1} parent=1 // pred_region
      _
    $region13: #{tpu_custom_call.1} parent=1 // pred_fallthru
      _
    // Predicated region
    $region14: #{tpu_custom_call.1} parent=1 // pred_check
      _
    $region15: #{tpu_custom_call.1} parent=1 // pred_check_branch
      %30 = sbr.rel (0) target = $region17
    $region16: #{tpu_custom_call.1} parent=1 // pred_region
      _
    $region17: #{tpu_custom_call.1} parent=1 // pred_fallthru
      _
    // Predicated region
    $region18: #{tpu_custom_call.1} parent=1 // pred_check
      _
    $region19: #{tpu_custom_call.1} parent=1 // pred_check_branch
      %32 = sbr.rel (0) target = $region21
    $region20: #{tpu_custom_call.1} parent=1 // pred_region
      %34 = dma.done [#allocation4], 2048
    $region21: #{tpu_custom_call.1} parent=1 // pred_fallthru
      _
    %v35 = vld [vmem:[%s0] sm:$0x3]
    %v36 = vld [vmem:[#allocation3] sm:$0xff]
    %v37 = vld [vmem:[#allocation3 + $0x8] sm:$0xff]
    %v38 = vld [vmem:[#allocation3 + $0x10] sm:$0xff]
    %v39 = vld [vmem:[#allocation3 + $0x18] sm:$0xff]
    %v40 = vld [vmem:[#allocation3 + $0x20] sm:$0xff]
    %v41 = vld [vmem:[#allocation3 + $0x28] sm:$0xff]
    %v42 = vld [vmem:[#allocation3 + $0x30] sm:$0xff]
    %v43 = vld [vmem:[#allocation3 + $0x38] sm:$0xff]
    %v44 = vld [vmem:[#allocation3 + $0x40] sm:$0xff]
    %v45 = vld [vmem:[#allocation3 + $0x48] sm:$0xff]
    %v46 = vld [vmem:[#allocation3 + $0x50] sm:$0xff]
    %v47 = vld [vmem:[#allocation3 + $0x58] sm:$0xff]
    %v48 = vld [vmem:[#allocation3 + $0x60] sm:$0xff]
    %v49 = vld [vmem:[#allocation3 + $0x68] sm:$0xff]
    %v50 = vld [vmem:[#allocation3 + $0x70] sm:$0xff]
    %v51 = vld [vmem:[#allocation3 + $0x78] sm:$0xff]
    %s52 = sld [smem:[#allocation2]]
    %v53 = vstv %s52
    %54 = vmatpush.msra.mxu0 %v51
    %55 = vmatpush.msra.mxu0 %v50
    %56 = vmatpush.msra.mxu0 %v49
    %57 = vmatpush.msra.mxu0 %v48
    %58 = vmatpush.msra.mxu0 %v47
    %59 = vmatpush.msra.mxu0 %v46
    %60 = vmatpush.msra.mxu0 %v45
    %61 = vmatpush.msra.mxu0 %v44
    %62 = vmatpush.msra.mxu0 %v43
    %63 = vmatpush.msra.mxu0 %v42
    %64 = vmatpush.msra.mxu0 %v41
    %65 = vmatpush.msra.mxu0 %v40
    %66 = vmatpush.msra.mxu0 %v39
    %67 = vmatpush.msra.mxu0 %v38
    %68 = vmatpush.msra.mxu0 %v37
    %69 = vmatpush.msra.mxu0 %v36
    %70 = vmatmul.f32.gmra.mxu0 %v35
    %v71 = vpop.f32.mrf.mxu0
    %v72 = vadd.f32 %v53, %v71
    %73 = vdwg.mxu0
    %v74 = vld [vmem:[%s2] sm:$0x1]
    %v75 = vtanh.pop %v72
    %v77 = vperm.slane %v74, 0
    %v79 = vmul.f32 %v77, %v75
    %v80 = vadd.f32 %v35, %v79
    %81 = vst [vmem:[#allocation6] sm:$0x3] %v80
    // Predicated region
    $region22: #{tpu_custom_call.1} parent=1 // pred_check
      _
    $region23: #{tpu_custom_call.1} parent=1 // pred_check_branch
      %83 = sbr.rel (0) target = $region25
    $region24: #{tpu_custom_call.1} parent=1 // pred_region
      %85 = vsyncadd [#allocation5], 0
      %s87 = sshll.u32 [#allocation6], 4
      %s88 = int_to_ptr.vmem [resolvable:$true] %s87
      %s89 = sshll.u32 %s4, 4
      %s90 = int_to_ptr.hbm [resolvable:$true] %s89
      %92 = dma.vmem_to_hbm [thread:$0]  %s88, 32, %s90, [#allocation5]
    $region25: #{tpu_custom_call.1} parent=1 // pred_fallthru
      _
    // Predicated region
    $region26: #{tpu_custom_call.1} parent=1 // pred_check
      _
    $region27: #{tpu_custom_call.1} parent=1 // pred_check_branch
      %94 = sbr.rel (0) target = $region29
    $region28: #{tpu_custom_call.1} parent=1 // pred_region
      %96 = dma.done [#allocation5], 32
    $region29: #{tpu_custom_call.1} parent=1 // pred_fallthru
      _
    %97 = vsyncpa [#allocation4], 1
    %98 = vsyncpa [#allocation5], 1

</llo_original>
